<compile_context>
chip_gen: v6e
topology: v6e:2x2x1
jax: 0.10.0
libtpu: 0.0.40
codegen_flags: <defaults>
</compile_context>

<pallas_src>
import math
import jax
import jax.numpy as jnp
from jax.experimental import pallas as pl
from jax.experimental.pallas import tpu as pltpu


def _pad_to(v, m):
    return (v + m - 1) // m * m


def _num_tensorcores():
    try:
        return int(getattr(jax.devices()[0], "num_cores", 1)) or 1
    except Exception:
        return 1


def _vmem_limit_bytes():
    # ~75% of physical VMEM: v5e/v6e have 128 MiB (-> 96 MiB), v7x has 64 MiB (-> 48 MiB).
    try:
        cap = int(pltpu.get_tpu_info().vmem_capacity_bytes)
        return max(32 << 20, min((cap * 3) // 4, 96 << 20))
    except Exception:
        return 64 << 20


_X_PANEL_BUDGET = 8 * 1024 * 1024  # bytes: resident x K-panel per i-tile (x2 if double-buffered)


# ----------------------------- Pallas matmul kernels -----------------------------

def _mm_kernel_single_k(x_ref, a_ref, o_ref):
    # Whole K fits in one block: write the MXU result directly, no scratch / pl.when.
    o_ref[...] = jnp.dot(x_ref[...], a_ref[...],
                         preferred_element_type=jnp.float32).astype(o_ref.dtype)


def _mm_kernel_resident_x(x_ref, a_ref, o_ref, acc_ref):
    # x_ref holds the full (tm, Kp) panel, resident across the j and k grid axes.
    k = pl.program_id(2)

    @pl.when(k == 0)
    def _():
        acc_ref[...] = jnp.zeros_like(acc_ref)

    tk = a_ref.shape[0]
    off = pl.multiple_of(k * tk, 128)
    acc_ref[...] += jnp.dot(x_ref[:, pl.ds(off, tk)], a_ref[...],
                            preferred_element_type=jnp.float32)

    @pl.when(k == pl.num_programs(2) - 1)
    def _():
        o_ref[...] = acc_ref[...].astype(o_ref.dtype)


def _mm_kernel_streamed_x(x_ref, a_ref, o_ref, acc_ref):
    @pl.when(pl.program_id(2) == 0)
    def _():
        acc_ref[...] = jnp.zeros_like(acc_ref)

    acc_ref[...] += jnp.dot(x_ref[...], a_ref[...],
                            preferred_element_type=jnp.float32)

    @pl.when(pl.program_id(2) == pl.num_programs(2) - 1)
    def _():
        o_ref[...] = acc_ref[...].astype(o_ref.dtype)


def pallas_matmul_blocked(xp, a_blocked, tm, tk, tn):
    """out = xp @ A with A stored pre-blocked by output tiles.

    xp: (Mp, Kp) bf16, padded.  a_blocked: (Nj, Kp, tn) bf16 -- column block j of the
    (Kp, Np) operator, so each (tk, tn) tile DMA is one contiguous 2*tk*tn-byte transfer.
    Returns (Mp, Nj*tn) f32.
    """
    Mp, Kp = xp.shape
    Nj, Kp2, tn2 = a_blocked.shape
    assert Kp == Kp2 and tn == tn2 and Mp % tm == 0 and Kp % tk == 0
    Np = Nj * tn
    nk = Kp // tk
    vmem = _vmem_limit_bytes()

    if nk == 1:
        return pl.pallas_call(
            _mm_kernel_single_k,
            out_shape=jax.ShapeDtypeStruct((Mp, Np), jnp.float32),
            grid_spec=pltpu.PrefetchScalarGridSpec(
                num_scalar_prefetch=0,
                grid=(Mp // tm, Nj),
                in_specs=[
                    pl.BlockSpec((tm, Kp), lambda i, j: (i, 0)),
                    pl.BlockSpec((None, Kp, tn), lambda i, j: (j, 0, 0)),
                ],
                out_specs=pl.BlockSpec((tm, tn), lambda i, j: (i, j)),
            ),
            compiler_params=pltpu.CompilerParams(
                dimension_semantics=("parallel", "parallel"),
                vmem_limit_bytes=vmem,
            ),
        )(xp, a_blocked)

    resident = tm * Kp * 2 <= _X_PANEL_BUDGET
    if resident:
        x_spec = pl.BlockSpec((tm, Kp), lambda i, j, k: (i, 0))   # resident across j, k
        kernel = _mm_kernel_resident_x
    else:
        x_spec = pl.BlockSpec((tm, tk), lambda i, j, k: (i, k))
        kernel = _mm_kernel_streamed_x

    return pl.pallas_call(
        kernel,
        out_shape=jax.ShapeDtypeStruct((Mp, Np), jnp.float32),
        grid_spec=pltpu.PrefetchScalarGridSpec(
            num_scalar_prefetch=0,
            grid=(Mp // tm, Nj, nk),
            in_specs=[
                x_spec,
                pl.BlockSpec((None, tk, tn), lambda i, j, k: (j, k, 0)),
            ],
            out_specs=pl.BlockSpec((tm, tn), lambda i, j, k: (i, j)),
            scratch_shapes=[pltpu.VMEM((tm, tn), jnp.float32)],
        ),
        compiler_params=pltpu.CompilerParams(
            dimension_semantics=("parallel", "parallel", "arbitrary"),
            vmem_limit_bytes=vmem,
        ),
    )(xp, a_blocked)


# -------------------- one-time build of the projection matrix --------------------

def build_radon_matrix(theta_deg, W, Kp, Np, tn, dtype=jnp.bfloat16):
    """Dense Radon operator, padded to (Kp, Np) and pre-blocked as (Np//tn, Kp, tn).

    Row index = y*W + x of the (padded) input image; column index = w_out*n_theta + theta
    (so the matmul output is already (N*C, W, n_theta) row-major -> no post transpose).
    Encodes: rotated = grid_sample(x, affine_grid(R_theta), bilinear, zeros,
    align_corners=False); out[..., w_out, theta] = rotated.sum over output rows h.
    Built per angle (lax.map) from separable 1-D one-hot interpolation stencils.
    """
    theta_deg = jnp.asarray(theta_deg, jnp.float32)
    n = int(theta_deg.shape[0])
    th = theta_deg * (jnp.pi / 180.0)                      # deg2rad
    cs = jnp.stack([jnp.cos(th), jnp.sin(th)], axis=-1)    # (n, 2)

    # affine_grid base coordinates, align_corners=False: (2k+1)/W - 1
    coords = (2.0 * jnp.arange(W, dtype=jnp.float32) + 1.0) / W - 1.0
    xw = coords[None, :]       # varies along output column w_out
    yh = coords[:, None]       # varies along output row h
    pix = jnp.arange(W, dtype=jnp.int32)

    def per_angle(c_s):
        cos, sin = c_s[0], c_s[1]
        gx = cos * xw + sin * yh            # (h, w) sampled x coord (normalized)
        gy = -sin * xw + cos * yh           # (h, w) sampled y coord (normalized)
        # grid_sample unnormalization, align_corners=False
        ix = ((gx + 1.0) * W - 1.0) * 0.5
        iy = ((gy + 1.0) * W - 1.0) * 0.5
        x0 = jnp.floor(ix)
        y0 = jnp.floor(iy)
        wx1 = ix - x0
        wy1 = iy - y0
        x0i = x0.astype(jnp.int32)
        y0i = y0.astype(jnp.int32)
        # Separable 1-D stencils; out-of-range taps match no pixel => zero row,
        # which reproduces padding_mode='zeros'.
        Yst = ((1.0 - wy1)[..., None] * (y0i[..., None] == pix)
               + wy1[..., None] * ((y0i + 1)[..., None] == pix))   # (h, w, y)
        Xst = ((1.0 - wx1)[..., None] * (x0i[..., None] == pix)
               + wx1[..., None] * ((x0i + 1)[..., None] == pix))   # (h, w, x)
        # B[y, x, w_out] = sum_h Yst[h, w, y] * Xst[h, w, x]
        B = jnp.einsum("hwy,hwx->yxw", Yst, Xst)
        return B.reshape(W * W, W).astype(dtype)

    blocks = jax.lax.map(per_angle, cs)                     # (n, W*W, W) bf16
    # Columns ordered (w_out * n_theta + theta).
    A = jnp.transpose(blocks, (1, 2, 0)).reshape(W * W, n * W)
    if (Kp, Np) != (W * W, n * W):
        A = jnp.pad(A, ((0, Kp - W * W), (0, Np - n * W)))
    # Pre-block by output (j) tiles so A-tile DMAs are contiguous.
    A = A.reshape(Kp, Np // tn, tn).transpose(1, 0, 2)       # (Nj, Kp, tn)
    return A


# ------------------------------- tile selection -------------------------------

def _pick_kn_tiles(K, Nc):
    Kp0 = _pad_to(K, 128)
    if Kp0 <= 2048:
        tk, Kp = Kp0, Kp0
    else:
        tk, Kp = 2048, _pad_to(K, 2048)
    Np0 = _pad_to(Nc, 128)
    if Np0 <= 512:
        tn, Np = Np0, Np0
    else:
        tn, Np = 512, _pad_to(Nc, 512)
    # Only split the j axis further on chips that actually have 2 TensorCores.
    if _num_tensorcores() >= 2 and Np // tn < 2 and tn >= 256 and tn % 256 == 0:
        tn //= 2
    return tk, Kp, tn, Np


def _pick_m_tile(M):
    """Returns (Mp, tm). Big tm for large batches so A is re-streamed fewer times."""
    if M <= 128:
        Mp = _pad_to(M, 16)
        return Mp, Mp
    for tm in (512, 256, 128):
        if _pad_to(M, 128) >= tm:
            return _pad_to(M, tm), tm
    return _pad_to(M, 128), 128


# ----------------------------------- Radon forward -----------------------------------

def make_radon_forward(in_size, theta_deg=None, circle=True):
    """Returns forward(x) equivalent to deepinv Radon(in_size, theta, circle)(x).

    The projection matrix A is built once here (bf16, padded, pre-blocked) and reused
    by every call; per-call work is a single Pallas matmul.
    """
    if theta_deg is None:
        theta_deg = jnp.arange(180, dtype=jnp.float32)
    theta_deg = jnp.asarray(theta_deg, jnp.float32)
    n_theta = int(theta_deg.shape[0])

    W_in = int(in_size)
    if not circle:
        diagonal = math.sqrt(2.0) * W_in
        pad = int(math.ceil(diagonal - W_in))
        new_center = (W_in + pad) // 2
        old_center = W_in // 2
        pad_before = new_center - old_center
        pad_width = (pad_before, pad - pad_before)
        W = W_in + pad
    else:
        pad_width = (0, 0)
        W = W_in

    K = W * W
    Nc = n_theta * W
    tk, Kp, tn, Np = _pick_kn_tiles(K, Nc)

    A = build_radon_matrix(theta_deg, W, Kp, Np, tn, dtype=jnp.bfloat16)
    A = jax.block_until_ready(A)        # materialized once, cached in the closure

    def _apply(x, a):
        Nb, C, Wx, Hx = x.shape
        assert Wx == Hx == W_in, "Input image must be square and match in_size"
        if not circle:
            x = jnp.pad(x, ((0, 0), (0, 0), pad_width, pad_width))
        M = Nb * C
        Mp, tm = _pick_m_tile(M)
        x_flat = x.reshape(M, K).astype(jnp.bfloat16)
        if (Mp, Kp) != (M, K):
            x_flat = jnp.pad(x_flat, ((0, Mp - M), (0, Kp - K)))
        out_p = pallas_matmul_blocked(x_flat, a, tm, tk, tn)   # (Mp, Np) f32
        # Columns already ordered (w_out, theta): no transpose needed.
        return out_p[:M, :Nc].reshape(Nb, C, W, n_theta)

    apply_jit = jax.jit(_apply)

    def forward(x):
        return apply_jit(x, A)

    return forward


# --------------------- independent reference (semantics check) ---------------------

def radon_reference(x, theta_deg):
    """Pure-JAX direct re-implementation of the torch hot loop (affine_grid +
    bilinear grid_sample, zeros padding, align_corners=False, then sum over rows)."""
    Nb, C, W, H = x.shape
    assert W == H
    th = jnp.asarray(theta_deg, jnp.float32) * (jnp.pi / 180.0)
    coords = (2.0 * jnp.arange(W, dtype=jnp.float32) + 1.0) / W - 1.0
    outs = []
    for t in range(th.shape[0]):
        c, s = jnp.cos(th[t]), jnp.sin(th[t])
        gx = c * coords[None, :] + s * coords[:, None]       # (h, w)
        gy = -s * coords[None, :] + c * coords[:, None]
        ix = ((gx + 1.0) * W - 1.0) * 0.5
        iy = ((gy + 1.0) * W - 1.0) * 0.5
        x0 = jnp.floor(ix).astype(jnp.int32)
        y0 = jnp.floor(iy).astype(jnp.int32)
        fx = ix - jnp.floor(ix)
        fy = iy - jnp.floor(iy)
        rotated = jnp.zeros((Nb, C, W, W), jnp.float32)
        for yc, xc, wgt in ((y0, x0, (1.0 - fy) * (1.0 - fx)),
                            (y0, x0 + 1, (1.0 - fy) * fx),
                            (y0 + 1, x0, fy * (1.0 - fx)),
                            (y0 + 1, x0 + 1, fy * fx)):
            valid = (yc >= 0) & (yc < W) & (xc >= 0) & (xc < W)
            vals = x[:, :, jnp.clip(yc, 0, W - 1), jnp.clip(xc, 0, W - 1)]
            rotated = rotated + jnp.where(valid, wgt, 0.0)[None, None] * vals
        outs.append(rotated.sum(axis=2))                     # sum over rows (dim=2)
    return jnp.stack(outs, axis=-1)                          # (Nb, C, W, n_theta)


def _rel_err(a, b):
    return float(jnp.linalg.norm(a - b) / (jnp.linalg.norm(b) + 1e-12))


# --------------------------------------- main ---------------------------------------

if __name__ == "__main__":
    key = jax.random.PRNGKey(0)
    x = jax.random.normal(key, (2, 4, 16, 16), dtype=jnp.float32)
    theta = jnp.arange(0.0, 180.0, 22.5, dtype=jnp.float32)   # 8 projection angles

    # circle=True: K = 256 -> single-K scratch-free kernel, resident x panel.
    radon = make_radon_forward(in_size=16, theta_deg=theta, circle=True)
    out = jax.block_until_ready(radon(x))
    assert out.shape == (2, 4, 16, 8), out.shape
    ref = radon_reference(x, theta)
    assert _rel_err(out, ref) < 1e-2, _rel_err(out, ref)

    # circle=False: zero-padded image (W=23) -> different padding / column blocking.
    radon_nc = make_radon_forward(in_size=16, theta_deg=theta, circle=False)
    out_nc = jax.block_until_ready(radon_nc(x))
    pad = int(math.ceil(math.sqrt(2.0) * 16 - 16))
    pb = (16 + pad) // 2 - 16 // 2
    assert out_nc.shape == (2, 4, 16 + pad, 8), out_nc.shape
    x_pad = jnp.pad(x, ((0, 0), (0, 0), (pb, pad - pb), (pb, pad - pb)))
    ref_nc = radon_reference(x_pad, theta)
    assert _rel_err(out_nc, ref_nc) < 1e-2, _rel_err(out_nc, ref_nc)

    # Larger image (W=68 after circle=False padding): exercises the multi-K
    # resident-x accumulator kernel with a pre-blocked A (2 output column blocks).
    key2 = jax.random.PRNGKey(1)
    x2 = jax.random.normal(key2, (2, 4, 48, 48), dtype=jnp.float32)
    radon_big = make_radon_forward(in_size=48, theta_deg=theta, circle=False)
    out_big = jax.block_until_ready(radon_big(x2))
    pad2 = int(math.ceil(math.sqrt(2.0) * 48 - 48))
    pb2 = (48 + pad2) // 2 - 48 // 2
    assert out_big.shape == (2, 4, 48 + pad2, 8), out_big.shape
    x2_pad = jnp.pad(x2, ((0, 0), (0, 0), (pb2, pad2 - pb2), (pb2, pad2 - pb2)))
    ref_big = radon_reference(x2_pad, theta)
    assert _rel_err(out_big, ref_big) < 1e-2, _rel_err(out_big, ref_big)

    print("KERNEL_OK")
</pallas_src>

<mosaic_0001>
module attributes {stable_mosaic.version = 11 : i64} {
  func.func @_mm_kernel_single_k(%arg0: i32, %arg1: i32, %arg2: memref<16x256xbf16, #tpu.memory_space<vmem>>, %arg3: memref<1x256x128xbf16, #tpu.memory_space<vmem>>, %arg4: memref<16x128xf32, #tpu.memory_space<vmem>>) attributes {dimension_semantics = [#tpu.dimension_semantics<parallel>, #tpu.dimension_semantics<parallel>], iteration_bounds = array<i64: 1, 1>, scalar_prefetch = 0 : i64, scratch_operands = 0 : i64, tpu.core_type = #tpu.core_type<tc>, window_params = [{transform_indices = @transform_0, window_bounds = array<i64: 16, 256>}, {transform_indices = @transform_1, window_bounds = array<i64: 1, 256, 128>}, {transform_indices = @transform_2, window_bounds = array<i64: 16, 128>}]} {
    %c0 = arith.constant 0 : index
    %c0_0 = arith.constant 0 : index
    %0 = vector.load %arg2[%c0, %c0_0] : memref<16x256xbf16, #tpu.memory_space<vmem>>, vector<16x256xbf16>
    %c0_1 = arith.constant 0 : index
    %c0_2 = arith.constant 0 : index
    %c0_3 = arith.constant 0 : index
    %1 = vector.load %arg3[%c0_1, %c0_2, %c0_3] : memref<1x256x128xbf16, #tpu.memory_space<vmem>>, vector<1x256x128xbf16>
    %2 = vector.shape_cast %1 : vector<1x256x128xbf16> to vector<256x128xbf16>
    %cst = arith.constant dense<0.000000e+00> : vector<16x128xf32>
    %3 = tpu.matmul %0, %2, %cst {dimension_numbers = #tpu.dot_dimension_numbers<[1], [0], [0], [1], [0, 0, 1, 1], [], []>} : vector<16x256xbf16>, vector<256x128xbf16>, vector<16x128xf32> -> vector<16x128xf32>
    %c0_4 = arith.constant 0 : index
    %c0_5 = arith.constant 0 : index
    %4 = vector.load %arg4[%c0_4, %c0_5] : memref<16x128xf32, #tpu.memory_space<vmem>>, vector<16x128xf32>
    tpu.vector_store %arg4[%c0_4, %c0_5], %3 {strides = array<i32>} : memref<16x128xf32, #tpu.memory_space<vmem>>, vector<16x128xf32>,
    return
  }
  func.func @transform_0(%arg0: i32, %arg1: i32) -> (i32, i32) {
    %c0_i32 = arith.constant 0 : i32
    %c0_i32_0 = arith.constant 0 : i32
    return %arg0, %c0_i32 : i32, i32
  }
  func.func @transform_1(%arg0: i32, %arg1: i32) -> (i32, i32, i32) {
    %c0_i32 = arith.constant 0 : i32
    %c0_i32_0 = arith.constant 0 : i32
    %c0_i32_1 = arith.constant 0 : i32
    return %arg1, %c0_i32, %c0_i32_0 : i32, i32, i32
  }
  func.func @transform_2(%arg0: i32, %arg1: i32) -> (i32, i32) {
    %c0_i32 = arith.constant 0 : i32
    return %arg0, %arg1 : i32, i32
  }
}

</mosaic_0001>

<llo_original>
// kernel: _apply.1
$region0: #{_apply.1}
  #allocation0 [shape = 'u32[]', space=smem, size = 0x4, offset = 0x4, fixed_abs, tag = 'smem constant byte address 0x4 - core index']
  #allocation1 [shape = 'u32[144,128]{1,0:T(1,128)}', space=vmem, size = 0x12000, scoped, tag = 'internal scratch']
  %s0 = inlined_call_operand.vmem [shape: bf16[16,256], index: 0, kind: input, shape index: {}]
  %s1 = inlined_call_operand.vmem [shape: bf16[1,256,128], index: 1, kind: input, shape index: {}]
  %s2 = inlined_call_operand.vmem [shape: f32[16,128], index: 2, kind: output, shape index: {}]
  %s3 = sld [smem:[#allocation0]]
  $region18: #{_apply.1} parent=0
    _
  %s5 = ssub.s32 1, %s3
  %s6 = scalar_select 0, %s5, %s3
  // Predicated region
  $region2: #{_apply.1} parent=0 // pred_check
    _
  $region3: #{_apply.1} parent=0 // pred_check_branch
    %8 = sbr.rel (0) target = $region5
  $region4: #{_apply.1} parent=0 // pred_region
    _
  $region5: #{_apply.1} parent=0 // pred_fallthru
    _
  // Predicated region
  $region6: #{_apply.1} parent=0 // pred_check
    _
  $region7: #{_apply.1} parent=0 // pred_check_branch
    %10 = sbr.rel (0) target = $region9
  $region8: #{_apply.1} parent=0 // pred_region
    _
  $region9: #{_apply.1} parent=0 // pred_fallthru
    _
  %v12 = vld [vmem:[%s0] sm:$0xff]
  %v13 = vld [vmem:[%s0 + $0x8] sm:$0xff]
  %v14 = vld [vmem:[%s1] sm:$0xf]
  %v15 = vld [vmem:[%s1 + $0x4] sm:$0xf]
  %v16 = vld [vmem:[%s1 + $0x8] sm:$0xf]
  %v17 = vld [vmem:[%s1 + $0xc] sm:$0xf]
  %v18 = vld [vmem:[%s1 + $0x10] sm:$0xf]
  %v19 = vld [vmem:[%s1 + $0x14] sm:$0xf]
  %v20 = vld [vmem:[%s1 + $0x18] sm:$0xf]
  %v21 = vld [vmem:[%s1 + $0x1c] sm:$0xf]
  %v22 = vld [vmem:[%s1 + $0x20] sm:$0xf]
  %v23 = vld [vmem:[%s1 + $0x24] sm:$0xf]
  %v24 = vld [vmem:[%s1 + $0x28] sm:$0xf]
  %v25 = vld [vmem:[%s1 + $0x2c] sm:$0xf]
  %v26 = vld [vmem:[%s1 + $0x30] sm:$0xf]
  %v27 = vld [vmem:[%s1 + $0x34] sm:$0xf]
  %v28 = vld [vmem:[%s1 + $0x38] sm:$0xf]
  %v29 = vld [vmem:[%s1 + $0x3c] sm:$0xf]
  %v30 = vld [vmem:[%s1 + $0x40] sm:$0xf]
  %v31 = vld [vmem:[%s1 + $0x44] sm:$0xf]
  %v32 = vld [vmem:[%s1 + $0x48] sm:$0xf]
  %v33 = vld [vmem:[%s1 + $0x4c] sm:$0xf]
  %v34 = vld [vmem:[%s1 + $0x50] sm:$0xf]
  %v35 = vld [vmem:[%s1 + $0x54] sm:$0xf]
  %v36 = vld [vmem:[%s1 + $0x58] sm:$0xf]
  %v37 = vld [vmem:[%s1 + $0x5c] sm:$0xf]
  %v38 = vld [vmem:[%s1 + $0x60] sm:$0xf]
  %v39 = vld [vmem:[%s1 + $0x64] sm:$0xf]
  %v40 = vld [vmem:[%s1 + $0x68] sm:$0xf]
  %v41 = vld [vmem:[%s1 + $0x6c] sm:$0xf]
  %v42 = vld [vmem:[%s1 + $0x70] sm:$0xf]
  %v43 = vld [vmem:[%s1 + $0x74] sm:$0xf]
  %v44 = vld [vmem:[%s1 + $0x78] sm:$0xf]
  %v45 = vld [vmem:[%s1 + $0x7c] sm:$0xf]
  %v48 = vunpack.c.l.b16 %v12
  %v49 = vunpack.c.h.b16 %v12
  %v50 = vunpack.c.l.b16 %v13
  %v51 = vunpack.c.h.b16 %v13
  %v52 = vpack.c.b16 %v50, %v48
  %v53 = vpack.c.b16 %v51, %v49
  %v88 = vunpack.c.l.b16 %v14
  %v89 = vunpack.c.l.b16 %v15
  %v90 = vunpack.c.l.b16 %v16
  %v91 = vunpack.c.l.b16 %v17
  %v92 = vunpack.c.l.b16 %v18
  %v93 = vunpack.c.l.b16 %v19
  %v94 = vunpack.c.l.b16 %v20
  %v95 = vunpack.c.l.b16 %v21
  %v96 = vunpack.c.l.b16 %v22
  %v97 = vunpack.c.l.b16 %v23
  %v98 = vunpack.c.l.b16 %v24
  %v99 = vunpack.c.l.b16 %v25
  %v100 = vunpack.c.l.b16 %v26
  %v101 = vunpack.c.l.b16 %v27
  %v102 = vunpack.c.l.b16 %v28
  %v103 = vunpack.c.l.b16 %v29
  %v104 = vunpack.c.l.b16 %v30
  %v105 = vunpack.c.l.b16 %v31
  %v106 = vunpack.c.l.b16 %v32
  %v107 = vunpack.c.l.b16 %v33
  %v108 = vunpack.c.l.b16 %v34
  %v109 = vunpack.c.l.b16 %v35
  %v110 = vunpack.c.l.b16 %v36
  %v111 = vunpack.c.l.b16 %v37
  %v112 = vunpack.c.l.b16 %v38
  %v113 = vunpack.c.l.b16 %v39
  %v114 = vunpack.c.l.b16 %v40
  %v115 = vunpack.c.l.b16 %v41
  %v116 = vunpack.c.l.b16 %v42
  %v117 = vunpack.c.l.b16 %v43
  %v118 = vunpack.c.l.b16 %v44
  %v119 = vunpack.c.l.b16 %v45
  %v120 = vpack.c.b16 %v89, %v88
  %v121 = vpack.c.b16 %v91, %v90
  %v122 = vpack.c.b16 %v93, %v92
  %v123 = vpack.c.b16 %v95, %v94
  %v124 = vpack.c.b16 %v97, %v96
  %v125 = vpack.c.b16 %v99, %v98
  %v126 = vpack.c.b16 %v101, %v100
  %v127 = vpack.c.b16 %v103, %v102
  %v128 = vpack.c.b16 %v105, %v104
  %v129 = vpack.c.b16 %v107, %v106
  %v130 = vpack.c.b16 %v109, %v108
  %v131 = vpack.c.b16 %v111, %v110
  %v132 = vpack.c.b16 %v113, %v112
  %v133 = vpack.c.b16 %v115, %v114
  %v134 = vpack.c.b16 %v117, %v116
  %v135 = vpack.c.b16 %v119, %v118
  %152 = vmatprep.subr.bf16.mxu0 0
  %153 = vmatpush1.bf16.msra.mxu0 %v127
  %154 = vmatprep.subr.bf16.mxu0 0
  %155 = vmatpush1.bf16.msra.mxu0 %v126
  %156 = vmatprep.subr.bf16.mxu0 0
  %157 = vmatpush1.bf16.msra.mxu0 %v125
  %158 = vmatprep.subr.bf16.mxu0 0
  %159 = vmatpush1.bf16.msra.mxu0 %v124
  %160 = vmatprep.subr.bf16.mxu0 0
  %161 = vmatpush1.bf16.msra.mxu0 %v123
  %162 = vmatprep.subr.bf16.mxu0 0
  %163 = vmatpush1.bf16.msra.mxu0 %v122
  %164 = vmatprep.subr.bf16.mxu0 0
  %165 = vmatpush1.bf16.msra.mxu0 %v121
  %166 = vmatprep.subr.bf16.mxu0 0
  %167 = vmatpush1.bf16.msra.mxu0 %v120
  %168 = vmatprep.subr.bf16.mxu0 0
  %169 = vmatpush2.bf16.msra.mxu0 %v135
  %170 = vmatprep.subr.bf16.mxu0 0
  %171 = vmatpush2.bf16.msra.mxu0 %v134
  %172 = vmatprep.subr.bf16.mxu0 0
  %173 = vmatpush2.bf16.msra.mxu0 %v133
  %174 = vmatprep.subr.bf16.mxu0 0
  %175 = vmatpush2.bf16.msra.mxu0 %v132
  %176 = vmatprep.subr.bf16.mxu0 0
  %177 = vmatpush2.bf16.msra.mxu0 %v131
  %178 = vmatprep.subr.bf16.mxu0 0
  %179 = vmatpush2.bf16.msra.mxu0 %v130
  %180 = vmatprep.subr.bf16.mxu0 0
  %181 = vmatpush2.bf16.msra.mxu0 %v129
  %182 = vmatprep.subr.bf16.mxu0 0
  %183 = vmatpush2.bf16.msra.mxu0 %v128
  %184 = vmatprep.mubr.bf16.mxu0 %v53
  %185 = vmatmul.mubr.bf16.gmra.mxu0 %v52
  %v186 = vpop.f32.mrf.mxu0
  %v187 = vadd.f32 0.0, %v186
  %v188 = vpop.f32.mrf.mxu0
  %v189 = vpop.f32.mrf.mxu0
  %v190 = vadd.f32 0.0, %v189
  %v191 = vpop.f32.mrf.mxu0
  %192 = vdwg.mxu0
  %193 = vst [vmem:[%s2] sm:$0xff] %v187
  %194 = vst [vmem:[%s2 + $0x8] sm:$0xff] %v190
  // Predicated region
  $region10: #{_apply.1} parent=0 // pred_check
    _
  $region11: #{_apply.1} parent=0 // pred_check_branch
    %196 = sbr.rel (0) target = $region13
  $region12: #{_apply.1} parent=0 // pred_region
    _
  $region13: #{_apply.1} parent=0 // pred_fallthru
    _
  // Predicated region
  $region14: #{_apply.1} parent=0 // pred_check
    _
  $region15: #{_apply.1} parent=0 // pred_check_branch
    %198 = sbr.rel (0) target = $region17
  $region16: #{_apply.1} parent=0 // pred_region
    _
  $region17: #{_apply.1} parent=0 // pred_fallthru
    _

</llo_original>
